<compile_context>
chip_gen: v5e
topology: v5e:2x2
jax: 0.10.0
libtpu: 0.0.40
codegen_flags: <defaults>
</compile_context>

<pallas_src>
import functools

import jax
import jax.numpy as jnp
import numpy as np
from jax.experimental import pallas as pl
from jax.experimental.pallas import tpu as pltpu


@functools.lru_cache(maxsize=None)
def _num_parallel_tiles():
    """2 row tiles on megacore chips (2 TC/chip: v4 / v5p / v7x), else 1."""
    try:
        kind = jax.devices()[0].device_kind.lower()
    except Exception:  # pragma: no cover - defensive
        return 1
    if any(tag in kind for tag in ("v7", "7x", "v5p", "v4")):
        return 2
    return 1


def _make_postprocess_kernel(num_fg: int, drop_col: int,
                             multiply_by_obj_scores: bool,
                             pack_w: int, num_verbs: int):
    """num_fg   : columns [0, num_fg) take part in the foreground max/argmax.
       drop_col : column excluded from the softmax denominator (hico), -1 = none.
       multiply_by_obj_scores : 'hoi' branch multiplies sigmoid(verbs) by scores.
       pack_w   : lane width of the packed output slab (multiple of 128).
       num_verbs: number of verb / attribute classes V."""

    def kernel(obj_logits_ref, verb_logits_ref, boxscale_ref, packed_ref):
        logits = obj_logits_ref[...].astype(jnp.float32)             # (T, C)
        T, C = logits.shape
        col = jax.lax.broadcasted_iota(jnp.int32, (T, C), 1)
        neg_inf = jnp.float32(-jnp.inf)

        # ---- softmax stats (no full softmax, no prob[:, :-1] lane slice) ----
        if drop_col >= 0:  # hico: drop second-to-last class from the softmax
            sum_logits = jnp.where(col == drop_col, neg_inf, logits)
        else:
            sum_logits = logits
        m = jnp.max(sum_logits, axis=-1, keepdims=True)              # (T, 1)
        sumexp = jnp.sum(jnp.exp(sum_logits - m), axis=-1, keepdims=True)

        # ---- foreground max / argmax directly on masked logits --------------
        # softmax is monotone per row, so this equals softmax[..., :-1].max/argmax.
        fg_logits = jnp.where(col < num_fg, logits, neg_inf)
        fg_max = jnp.max(fg_logits, axis=-1, keepdims=True)          # (T, 1)
        col_f = col.astype(jnp.float32)
        # NOTE: the label is an index encoded in f32 (exact for C << 2^24) and
        # the tie-break is "first argmax" via min-index-over-(== fg_max); both
        # rely on fg_max being computed from this same f32 tensor.  Do not move
        # this comparison to bf16.
        labels_f = jnp.min(jnp.where(fg_logits == fg_max, col_f, jnp.float32(C)),
                           axis=-1, keepdims=True)
        scores = jnp.exp(fg_max - m) * pl.reciprocal(sumexp, approx=True)

        # ---- verb / attribute scores ----------------------------------------
        vs = jax.nn.sigmoid(verb_logits_ref[...].astype(jnp.float32))  # (T, V)
        if multiply_by_obj_scores:
            vs = vs * scores

        # ---- boxes: cxcywh -> xyxy on the VPU, sub & obj in one slab --------
        # lanes: [s_cx s_cy o_cx o_cy | s_w s_h o_w o_h | img_w img_h img_w img_h]
        bs = boxscale_ref[...].astype(jnp.float32)                   # (T, 12)
        centers = bs[:, 0:4]
        half = 0.5 * bs[:, 4:8]
        sc = bs[:, 8:12]
        xy1 = (centers - half) * sc                                   # (T, 4)
        xy2 = (centers + half) * sc                                   # (T, 4)

        # ---- single full-lane-width packed store -----------------------------
        pieces = [scores, labels_f, xy1, xy2, vs]
        pad = pack_w - (10 + num_verbs)
        if pad > 0:
            pieces.append(jnp.zeros((T, pad), jnp.float32))
        packed_ref[...] = jnp.concatenate(pieces, axis=-1)

    return kernel


@functools.partial(jax.jit, static_argnames=("dataset", "multiply_by_obj_scores"))
def _postprocess_core(obj_logits, verb_logits, sub_boxes, obj_boxes, target_sizes,
                      dataset="vcoco", multiply_by_obj_scores=True):
    B, Q, C = obj_logits.shape
    V = verb_logits.shape[-1]
    R = B * Q

    if dataset == "hico":
        num_fg, drop_col = C - 2, C - 2   # fg classes [0..C-3]; drop col C-2 from softmax
    else:                                 # vcoco
        num_fg, drop_col = C - 1, -1

    # Packed output lane width: [score, label, 8 box coords, V verbs, pad] -> mult of 128
    pack_w = -(-(10 + V) // 128) * 128

    # --- row tiling: one tile per TensorCore; clamp only on (unlikely) VMEM pressure ---
    base_tiles = _num_parallel_tiles() if R >= 32 else 1
    bytes_per_row = 2 * (C * obj_logits.dtype.itemsize          # double-buffered inputs
                         + V * verb_logits.dtype.itemsize
                         + 12 * 4 + pack_w * 4)                 # boxes/scale + packed out
    max_rows = max(16, ((8 << 20) // max(bytes_per_row, 1)) // 16 * 16)
    num_tiles = max(base_tiles, -(-R // max_rows))
    rows_per_tile = -(-R // num_tiles)
    tile = -(-rows_per_tile // 16) * 16   # multiple of 16: legal sublanes for f32 & bf16
    R_pad = tile * num_tiles

    # --- inputs: logits stay in their native dtype (bf16 halves DMA bytes) ---
    obj_l = obj_logits.reshape(R, C)
    verb_l = verb_logits.reshape(R, V)

    sb = sub_boxes.astype(jnp.float32)
    ob = obj_boxes.astype(jnp.float32)
    img_h = target_sizes[:, 0].astype(jnp.float32)
    img_w = target_sizes[:, 1].astype(jnp.float32)
    scale = jnp.stack([img_w, img_h, img_w, img_h], axis=1)           # (B, 4)
    boxscale = jnp.concatenate(
        [sb[..., 0:2], ob[..., 0:2], sb[..., 2:4], ob[..., 2:4],
         jnp.broadcast_to(scale[:, None, :], (B, Q, 4))],
        axis=-1).reshape(R, 12)                                       # (R, 12)

    def pad_rows(x):
        return jnp.pad(x, ((0, R_pad - R), (0, 0)))

    obj_l = pad_rows(obj_l)
    verb_l = pad_rows(verb_l)
    boxscale = pad_rows(boxscale)

    kernel = _make_postprocess_kernel(num_fg, drop_col, multiply_by_obj_scores,
                                      pack_w, V)

    cost = pl.CostEstimate(
        flops=int(R_pad * (6 * C + 4 * V + 40)),
        transcendentals=int(R_pad * (C + V + 2)),
        bytes_accessed=int(obj_l.size * obj_l.dtype.itemsize
                           + verb_l.size * verb_l.dtype.itemsize
                           + boxscale.size * 4
                           + R_pad * pack_w * 4),
    )

    packed = pl.pallas_call(
        kernel,
        out_shape=jax.ShapeDtypeStruct((R_pad, pack_w), jnp.float32),
        grid=(num_tiles,),
        in_specs=[
            pl.BlockSpec((tile, C), lambda i: (i, 0)),
            pl.BlockSpec((tile, V), lambda i: (i, 0)),
            pl.BlockSpec((tile, 12), lambda i: (i, 0)),
        ],
        out_specs=pl.BlockSpec((tile, pack_w), lambda i: (i, 0)),
        compiler_params=pltpu.CompilerParams(dimension_semantics=("parallel",)),
        cost_estimate=cost,
    )(obj_l, verb_l, boxscale)

    # ---- unpack the lane-dense slab (tiny XLA glue); padded rows R..R_pad are
    # garbage and are sliced off here -- nothing downstream may read them. ----
    packed = packed[:R]
    obj_scores = packed[:, 0].reshape(B, Q)
    obj_labels = packed[:, 1].astype(jnp.int32).reshape(B, Q)   # small ints, exact in f32
    xy1 = packed[:, 2:6]    # [s_x1, s_y1, o_x1, o_y1]
    xy2 = packed[:, 6:10]   # [s_x2, s_y2, o_x2, o_y2]
    sub_b = jnp.concatenate([xy1[:, 0:2], xy2[:, 0:2]], axis=-1).reshape(B, Q, 4)
    obj_b = jnp.concatenate([xy1[:, 2:4], xy2[:, 2:4]], axis=-1).reshape(B, Q, 4)
    verb_scores = packed[:, 10:10 + V].reshape(B, Q, V)
    return obj_scores, obj_labels, verb_scores, sub_b, obj_b


def postprocess_hoi_att(outputs, target_sizes, subject_category_id):
    """JAX/Pallas equivalent of PostProcessHOI_ATT.forward.

    The per-image dict assembly is batched (one concat per field + one
    device->host transfer), mirroring the original module's `.to('cpu')`.
    """
    if outputs["type"] == "hoi":
        _, obj_labels, verb_scores, sub_boxes, obj_boxes = _postprocess_core(
            outputs["pred_obj_logits"], outputs["pred_logits"],
            outputs["pred_sub_boxes"], outputs["pred_obj_boxes"],
            target_sizes, dataset=outputs["dataset"], multiply_by_obj_scores=True)
        B, Q = obj_labels.shape
        labels_all = jnp.concatenate(
            [jnp.full((B, Q), subject_category_id, dtype=obj_labels.dtype),
             obj_labels], axis=1)                                  # (B, 2Q)
        boxes_all = jnp.concatenate([sub_boxes, obj_boxes], axis=1)  # (B, 2Q, 4)
        labels_np, boxes_np, verbs_np = jax.device_get(
            (labels_all, boxes_all, verb_scores))
        ids = np.arange(2 * Q)
        results = []
        for b in range(B):
            results.append({
                "labels": labels_np[b], "boxes": boxes_np[b],
                "verb_scores": verbs_np[b],
                "sub_ids": ids[:Q], "obj_ids": ids[Q:],
            })
        return results
    elif outputs["type"] == "att":
        # att branch always uses the hico-style column drop (matches PyTorch),
        # and plain sigmoid attrs (no obj-score multiply).
        _, obj_labels, attr_scores, _, obj_boxes = _postprocess_core(
            outputs["pred_obj_logits"], outputs["pred_logits"],
            outputs["pred_obj_boxes"], outputs["pred_obj_boxes"],
            target_sizes, dataset="hico", multiply_by_obj_scores=False)
        B, Q = obj_labels.shape
        labels_np, boxes_np, attrs_np = jax.device_get(
            (obj_labels, obj_boxes, attr_scores))
        ids = np.arange(Q)
        results = []
        for b in range(B):
            results.append({"labels": labels_np[b], "boxes": boxes_np[b],
                            "attr_scores": attrs_np[b], "obj_ids": ids})
        return results
    else:
        raise ValueError("unknown output type")


# ----------------------------- reference (pure JAX) ---------------------------
def _reference(obj_logits, verb_logits, sub_boxes, obj_boxes, target_sizes,
               dataset, multiply):
    if dataset == "hico":
        obj_logits = jnp.concatenate(
            [obj_logits[..., :-2], obj_logits[..., -1:]], axis=-1)
    prob = jax.nn.softmax(obj_logits, axis=-1)
    obj_scores = prob[..., :-1].max(-1)
    obj_labels = prob[..., :-1].argmax(-1)
    vs = jax.nn.sigmoid(verb_logits)
    if multiply:
        vs = vs * obj_scores[..., None]
    h = target_sizes[:, 0].astype(jnp.float32)
    w = target_sizes[:, 1].astype(jnp.float32)
    scale = jnp.stack([w, h, w, h], axis=1)[:, None, :]

    def cvt(bx):
        cx, cy, ww, hh = bx[..., 0], bx[..., 1], bx[..., 2], bx[..., 3]
        return jnp.stack([cx - 0.5 * ww, cy - 0.5 * hh,
                          cx + 0.5 * ww, cy + 0.5 * hh], axis=-1)

    return obj_scores, obj_labels, vs, cvt(sub_boxes) * scale, cvt(obj_boxes) * scale


if __name__ == "__main__":
    key = jax.random.PRNGKey(0)
    B, Q, C, V = 2, 8, 12, 16          # batch, queries, obj classes, verb classes
    k1, k2, k3, k4 = jax.random.split(key, 4)
    obj_logits = jax.random.normal(k1, (B, Q, C), dtype=jnp.float32)
    verb_logits = jax.random.normal(k2, (B, Q, V), dtype=jnp.float32)
    sub_boxes = jax.random.uniform(k3, (B, Q, 4), dtype=jnp.float32,
                                   minval=0.1, maxval=0.9)
    obj_boxes = jax.random.uniform(k4, (B, Q, 4), dtype=jnp.float32,
                                   minval=0.1, maxval=0.9)
    target_sizes = jnp.array([[480.0, 640.0], [512.0, 384.0]], dtype=jnp.float32)

    for dataset in ("vcoco", "hico"):
        outs = _postprocess_core(obj_logits, verb_logits, sub_boxes, obj_boxes,
                                 target_sizes, dataset=dataset,
                                 multiply_by_obj_scores=True)
        outs = jax.block_until_ready(outs)
        refs = _reference(obj_logits, verb_logits, sub_boxes, obj_boxes,
                          target_sizes, dataset, True)
        o_sc, o_lb, o_vs, o_sb, o_ob = [np.asarray(x) for x in outs]
        r_sc, r_lb, r_vs, r_sb, r_ob = [np.asarray(x) for x in refs]
        # scores use the EUP approx reciprocal -> slightly looser tolerance
        np.testing.assert_allclose(o_sc, r_sc, rtol=2e-3, atol=2e-3)
        np.testing.assert_array_equal(o_lb, r_lb)
        np.testing.assert_allclose(o_vs, r_vs, rtol=2e-3, atol=2e-3)
        np.testing.assert_allclose(o_sb, r_sb, rtol=1e-5, atol=1e-5)
        np.testing.assert_allclose(o_ob, r_ob, rtol=1e-5, atol=1e-5)

    # native-bf16 logits path (no wrapper-side f32 cast; kernel upcasts internally)
    obj_bf = obj_logits.astype(jnp.bfloat16)
    verb_bf = verb_logits.astype(jnp.bfloat16)
    outs_bf = jax.block_until_ready(
        _postprocess_core(obj_bf, verb_bf, sub_boxes, obj_boxes, target_sizes,
                          dataset="vcoco", multiply_by_obj_scores=True))
    refs_bf = _reference(obj_bf.astype(jnp.float32), verb_bf.astype(jnp.float32),
                         sub_boxes, obj_boxes, target_sizes, "vcoco", True)
    np.testing.assert_allclose(np.asarray(outs_bf[0]), np.asarray(refs_bf[0]),
                               rtol=2e-3, atol=2e-3)
    np.testing.assert_array_equal(np.asarray(outs_bf[1]), np.asarray(refs_bf[1]))

    # full module-style call ('hoi' branch) + 'att' branch
    hoi_outputs = {"type": "hoi", "dataset": "vcoco",
                   "pred_obj_logits": obj_logits, "pred_logits": verb_logits,
                   "pred_sub_boxes": sub_boxes, "pred_obj_boxes": obj_boxes}
    results = postprocess_hoi_att(hoi_outputs, target_sizes, subject_category_id=1)
    assert results[0]["verb_scores"].shape == (Q, V)
    assert results[0]["boxes"].shape == (2 * Q, 4)

    att_outputs = {"type": "att",
                   "pred_obj_logits": obj_logits, "pred_logits": verb_logits,
                   "pred_obj_boxes": obj_boxes}
    att_results = postprocess_hoi_att(att_outputs, target_sizes,
                                      subject_category_id=1)
    assert att_results[0]["attr_scores"].shape == (Q, V)

    print("KERNEL_OK")
</pallas_src>

<mosaic_0001>
module attributes {stable_mosaic.version = 11 : i64} {
  func.func @kernel(%arg0: i32, %arg1: memref<16x12xf32, #tpu.memory_space<vmem>>, %arg2: memref<16x16xf32, #tpu.memory_space<vmem>>, %arg3: memref<16x12xf32, #tpu.memory_space<vmem>>, %arg4: memref<16x128xf32, #tpu.memory_space<vmem>>) attributes {dimension_semantics = [#tpu.dimension_semantics<parallel>], iteration_bounds = array<i64: 1>, scalar_prefetch = 0 : i64, scratch_operands = 0 : i64, tpu.core_type = #tpu.core_type<tc>, window_params = [{transform_indices = @transform_0, window_bounds = array<i64: 16, 12>}, {transform_indices = @transform_1, window_bounds = array<i64: 16, 16>}, {transform_indices = @transform_2, window_bounds = array<i64: 16, 12>}, {transform_indices = @transform_3, window_bounds = array<i64: 16, 128>}]} {
    %c0 = arith.constant 0 : index
    %c0_0 = arith.constant 0 : index
    %0 = vector.load %arg1[%c0, %c0_0] : memref<16x12xf32, #tpu.memory_space<vmem>>, vector<16x12xf32>
    %1 = tpu.iota {dimensions = array<i32: 1>} : vector<16x12xi32>
    %cst = arith.constant dense<0xFF800000> : vector<16xf32>
    %2 = vector.multi_reduction <maximumf>, %0, %cst [1] : vector<16x12xf32> to vector<16xf32>
    %3 = vector.shape_cast %2 : vector<16xf32> to vector<16x1xf32>
    %4 = vector.broadcast %3 : vector<16x1xf32> to vector<16x12xf32>
    %5 = arith.subf %0, %4 : vector<16x12xf32>
    %6 = math.exp %5 : vector<16x12xf32>
    %cst_1 = arith.constant dense<0.000000e+00> : vector<16xf32>
    %7 = vector.multi_reduction <add>, %6, %cst_1 [1] : vector<16x12xf32> to vector<16xf32>
    %8 = vector.shape_cast %7 : vector<16xf32> to vector<16x1xf32>
    %c11_i32 = arith.constant 11 : i32
    %9 = vector.broadcast %c11_i32 : i32 to vector<16x12xi32>
    %10 = arith.cmpi slt, %1, %9 : vector<16x12xi32>
    %cst_2 = arith.constant 0xFF800000 : f32
    %11 = vector.broadcast %cst_2 : f32 to vector<16x12xf32>
    %12 = arith.select %10, %0, %11 : vector<16x12xi1>, vector<16x12xf32>
    %cst_3 = arith.constant dense<0xFF800000> : vector<16xf32>
    %13 = vector.multi_reduction <maximumf>, %12, %cst_3 [1] : vector<16x12xf32> to vector<16xf32>
    %14 = vector.shape_cast %13 : vector<16xf32> to vector<16x1xf32>
    %15 = arith.sitofp %1 : vector<16x12xi32> to vector<16x12xf32>
    %16 = vector.broadcast %14 : vector<16x1xf32> to vector<16x12xf32>
    %17 = arith.cmpf oeq, %12, %16 : vector<16x12xf32>
    %cst_4 = arith.constant 1.200000e+01 : f32
    %18 = vector.broadcast %cst_4 : f32 to vector<16x12xf32>
    %19 = arith.select %17, %15, %18 : vector<16x12xi1>, vector<16x12xf32>
    %cst_5 = arith.constant dense<0x7F800000> : vector<16xf32>
    %20 = vector.multi_reduction <minimumf>, %19, %cst_5 [1] : vector<16x12xf32> to vector<16xf32>
    %21 = vector.shape_cast %20 : vector<16xf32> to vector<16x1xf32>
    %22 = arith.subf %14, %3 : vector<16x1xf32>
    %23 = math.exp %22 : vector<16x1xf32>
    %24 = tpu.reciprocal %8 {approx = true} : vector<16x1xf32> -> vector<16x1xf32>
    %25 = arith.mulf %23, %24 : vector<16x1xf32>
    %c0_6 = arith.constant 0 : index
    %c0_7 = arith.constant 0 : index
    %26 = vector.load %arg2[%c0_6, %c0_7] : memref<16x16xf32, #tpu.memory_space<vmem>>, vector<16x16xf32>
    %27 = arith.negf %26 : vector<16x16xf32>
    %28 = math.exp %27 : vector<16x16xf32>
    %cst_8 = arith.constant 1.000000e+00 : f32
    %29 = vector.broadcast %cst_8 : f32 to vector<16x16xf32>
    %30 = arith.addf %29, %28 : vector<16x16xf32>
    %31 = arith.divf %29, %30 : vector<16x16xf32>
    %32 = vector.broadcast %25 : vector<16x1xf32> to vector<16x16xf32>
    %33 = arith.mulf %31, %32 : vector<16x16xf32>
    %c0_9 = arith.constant 0 : index
    %c0_10 = arith.constant 0 : index
    %34 = vector.load %arg3[%c0_9, %c0_10] : memref<16x12xf32, #tpu.memory_space<vmem>>, vector<16x12xf32>
    %35 = vector.extract_strided_slice %34 {offsets = [0, 0], sizes = [16, 4], strides = [1, 1]} : vector<16x12xf32> to vector<16x4xf32>
    %36 = vector.extract_strided_slice %34 {offsets = [0, 4], sizes = [16, 4], strides = [1, 1]} : vector<16x12xf32> to vector<16x4xf32>
    %cst_11 = arith.constant 5.000000e-01 : f32
    %37 = vector.broadcast %cst_11 : f32 to vector<16x4xf32>
    %38 = arith.mulf %37, %36 : vector<16x4xf32>
    %39 = vector.extract_strided_slice %34 {offsets = [0, 8], sizes = [16, 4], strides = [1, 1]} : vector<16x12xf32> to vector<16x4xf32>
    %40 = arith.subf %35, %38 : vector<16x4xf32>
    %41 = arith.mulf %40, %39 : vector<16x4xf32>
    %42 = arith.addf %35, %38 : vector<16x4xf32>
    %43 = arith.mulf %42, %39 : vector<16x4xf32>
    %cst_12 = arith.constant 0.000000e+00 : f32
    %44 = vector.broadcast %cst_12 : f32 to vector<16x102xf32>
    %45 = tpu.concatenate %25, %21, %41, %43, %33, %44 in 1 : vector<16x1xf32>, vector<16x1xf32>, vector<16x4xf32>, vector<16x4xf32>, vector<16x16xf32>, vector<16x102xf32> -> vector<16x128xf32>
    %c0_13 = arith.constant 0 : index
    %c0_14 = arith.constant 0 : index
    %46 = vector.load %arg4[%c0_13, %c0_14] : memref<16x128xf32, #tpu.memory_space<vmem>>, vector<16x128xf32>
    tpu.vector_store %arg4[%c0_13, %c0_14], %45 {strides = array<i32>} : memref<16x128xf32, #tpu.memory_space<vmem>>, vector<16x128xf32>,
    return
  }
  func.func @transform_0(%arg0: i32) -> (i32, i32) {
    %c0_i32 = arith.constant 0 : i32
    %c0_i32_0 = arith.constant 0 : i32
    return %arg0, %c0_i32 : i32, i32
  }
  func.func @transform_1(%arg0: i32) -> (i32, i32) {
    %c0_i32 = arith.constant 0 : i32
    %c0_i32_0 = arith.constant 0 : i32
    return %arg0, %c0_i32 : i32, i32
  }
  func.func @transform_2(%arg0: i32) -> (i32, i32) {
    %c0_i32 = arith.constant 0 : i32
    %c0_i32_0 = arith.constant 0 : i32
    return %arg0, %c0_i32 : i32, i32
  }
  func.func @transform_3(%arg0: i32) -> (i32, i32) {
    %c0_i32 = arith.constant 0 : i32
    %c0_i32_0 = arith.constant 0 : i32
    return %arg0, %c0_i32 : i32, i32
  }
}

</mosaic_0001>

<llo_original>
// kernel: squeeze.2
$region0: #{squeeze.2}
  %s0 = inlined_call_operand.vmem [shape: f32[16], index: 0, kind: input, shape index: {}]
  %s1 = inlined_call_operand.hbm [shape: f32[2,8], index: 1, kind: output, shape index: {}]
  $region1: #{squeeze.2} parent=0
    #allocation0 [shape = 'u8[1024]{0}', space=vmem, size = 0x400, scoped, tag = 'operand span for operand 1']
    #allocation1 [shape = 's32[1]{0}', space=sflag, size = 0x4, scoped, tag = 'scoped memory for squeeze.2']
    #allocation2 [shape = 'u8[4096]{0}', space=vmem, size = 0x1000, scoped, tag = 'scoped mem for output reshape']
    #allocation3 [shape = 'u8[4096]{0}', space=vmem, size = 0x1000, scoped, tag = 'scoped mem for input reshape']
    %2 = vsyncpa [#allocation1], 0
    %s4 = ssub.s32 2, 1
    %v5 = vld [vmem:[%s0] sm:%s4]
    %6 = vst [vmem:[#allocation3] sm:%s4] %v5
    %v7 = vld [vmem:[#allocation3] sm:$0x1]
    %vm8 = vcmask 64512
    %9 = vst.msk [vmem:[#allocation2] sm:$0x1] %vm8, %v7
    %v10 = vld [vmem:[#allocation3] sm:$0x1]
    %11 = vrot.lane.b32.xlu0 %v10, 120
    %v12 = vpop.permute.xlu0 %11
    %vm13 = vcmask 64512
    %s14 = scalar_lea.vmem [#allocation2], 1
    %15 = vst.msk [vmem:[%s14] sm:$0x1] %vm13, %v12
    %s17 = ssub.s32 4, 1
    %v18 = vld [vmem:[#allocation2] sm:%s17]
    %s20 = ssub.s32 4, 1
    %21 = vst [vmem:[#allocation0] sm:%s20] %v18
    %23 = vsyncadd [#allocation1], 0
    %s25 = sshll.u32 [#allocation0], 4
    %s26 = int_to_ptr.vmem [resolvable:$true] %s25
    %s27 = sshll.u32 %s1, 4
    %s28 = int_to_ptr.hbm [resolvable:$true] %s27
    %30 = dma.vmem_to_hbm [thread:$0]  %s26, 32, %s28, [#allocation1]
    %32 = dma.done [#allocation1], 32
    %33 = vsyncpa [#allocation1], 1

// kernel: _postprocess_core.1
$region0: #{_postprocess_core.1}
  #allocation0 [shape = 'u32[]', space=smem, size = 0x4, offset = 0x4, fixed_abs, tag = 'smem constant byte address 0x4 - core index']
  #allocation1 [shape = 'u32[72,128]{1,0:T(1,128)}', space=vmem, size = 0x9000, scoped, tag = 'internal scratch']
  %s0 = inlined_call_operand.vmem [shape: f32[16,12], index: 0, kind: input, shape index: {}]
  %s1 = inlined_call_operand.vmem [shape: f32[16,16], index: 1, kind: input, shape index: {}]
  %s2 = inlined_call_operand.vmem [shape: f32[16,12], index: 2, kind: input, shape index: {}]
  %s3 = inlined_call_operand.vmem [shape: f32[16,128], index: 3, kind: output, shape index: {}]
  %s4 = sld [smem:[#allocation0]]
  $region22: #{_postprocess_core.1} parent=0
    _
  %s6 = ssub.s32 1, %s4
  %s7 = scalar_select 0, %s6, %s4
  // Predicated region
  $region2: #{_postprocess_core.1} parent=0 // pred_check
    _
  $region3: #{_postprocess_core.1} parent=0 // pred_check_branch
    %9 = sbr.rel (0) target = $region5
  $region4: #{_postprocess_core.1} parent=0 // pred_region
    _
  $region5: #{_postprocess_core.1} parent=0 // pred_fallthru
    _
  // Predicated region
  $region6: #{_postprocess_core.1} parent=0 // pred_check
    _
  $region7: #{_postprocess_core.1} parent=0 // pred_check_branch
    %11 = sbr.rel (0) target = $region9
  $region8: #{_postprocess_core.1} parent=0 // pred_region
    _
  $region9: #{_postprocess_core.1} parent=0 // pred_fallthru
    _
  // Predicated region
  $region10: #{_postprocess_core.1} parent=0 // pred_check
    _
  $region11: #{_postprocess_core.1} parent=0 // pred_check_branch
    %13 = sbr.rel (0) target = $region13
  $region12: #{_postprocess_core.1} parent=0 // pred_region
    _
  $region13: #{_postprocess_core.1} parent=0 // pred_fallthru
    _
  %v14 = vld [vmem:[%s0] sm:$0xff]
  %v15 = vld [vmem:[%s0 + $0x8] sm:$0xff]
  %v16 = vlaneseq
  %v17 = vand.u32 %v16, 127
  %vm18 = vcmask 97280
  %v19 = vsel %vm18, %v14, -inf
  %20 = vmax.xlane.f32.xlu0 %v19
  %v21 = vpop.xlane.xlu0 %20
  %v22 = vsel %vm18, %v15, -inf
  %23 = vmax.xlane.f32.xlu0 %v22
  %v24 = vpop.xlane.xlu0 %23
  %v25 = vsub.f32 %v14, %v21
  %v26 = vsub.f32 %v15, %v24
  %v27 = vmul.f32 %v25, 1.442695
  %v28 = vpow.pop %v27
  %v29 = vmul.f32 %v26, 1.442695
  %v30 = vpow.pop %v29
  %v31 = vsel %vm18, %v28, 0.0
  %32 = vadd.xlane.f32.xlu0 %v31
  %v33 = vpop.xlane.xlu0 %32
  %v34 = vsel %vm18, %v30, 0.0
  %35 = vadd.xlane.f32.xlu0 %v34
  %v36 = vpop.xlane.xlu0 %35
  %vm37 = vcmp.lt.s32.totalorder %v17, 11
  %v38 = vsel %vm37, %v14, -inf
  %v39 = vsel %vm37, %v15, -inf
  %v40 = vsel %vm18, %v38, -inf
  %41 = vmax.xlane.f32.xlu0 %v40
  %v42 = vpop.xlane.xlu0 %41
  %v43 = vsel %vm18, %v39, -inf
  %44 = vmax.xlane.f32.xlu0 %v43
  %v45 = vpop.xlane.xlu0 %44
  %v46 = vcvt.s32.f32 %v17
  %vm47 = vcmp.eq.f32.partialorder %v38, %v42
  %vm48 = vcmp.eq.f32.partialorder %v39, %v45
  %v49 = vsel %vm47, %v46, 12.0
  %v50 = vsel %vm48, %v46, 12.0
  %v51 = vsel %vm18, %v49, inf
  %52 = vmin.xlane.f32.xlu0 %v51
  %v53 = vpop.xlane.xlu0 %52
  %v54 = vsel %vm18, %v50, inf
  %55 = vmin.xlane.f32.xlu0 %v54
  %v56 = vpop.xlane.xlu0 %55
  %v57 = vsub.f32 %v42, %v21
  %v58 = vsub.f32 %v45, %v24
  %v59 = vmul.f32 %v57, 1.442695
  %v60 = vpow.pop %v59
  %v61 = vmul.f32 %v58, 1.442695
  %v62 = vpow.pop %v61
  %v63 = vrcp.pop %v33
  %v64 = vrcp.pop %v36
  %v65 = vmul.f32 %v60, %v63
  %v66 = vmul.f32 %v62, %v64
  %v67 = vld [vmem:[%s1] sm:$0xff]
  %v68 = vld [vmem:[%s1 + $0x8] sm:$0xff]
  %v69 = vxor.u32 %v67, 2147483648
  %v70 = vxor.u32 %v68, 2147483648
  %v71 = vmul.f32 %v69, 1.442695
  %v72 = vpow.pop %v71
  %v73 = vmul.f32 %v70, 1.442695
  %v74 = vpow.pop %v73
  %v75 = vadd.f32 %v72, 1.0
  %v76 = vadd.f32 %v74, 1.0
  %v77 = vrcp.pop %v75
  %v78 = vmul.f32 %v75, %v77
  %v79 = vsub.f32 1.0, %v78
  %v80 = vmul.f32 %v77, %v79
  %v81 = vadd.f32 %v77, %v80
  %vm82 = vweird.f32 %v75
  %vm83 = vweird.f32 %v77
  %vm84 = vmor %vm82, %vm83
  %v85 = vsel %vm84, %v77, %v81
  %v86 = vand.u32 2147483647, %v75
  %vm87 = vcmp.eq.f32.partialorder %v86, 8.507059e+37
  %v88 = vand.u32 %v75, 2147483648
  %v89 = vor.u32 1.1754944e-38, %v88
  %v90 = vsel %vm87, %v89, %v85
  %v91 = vmul.f32 1.0, %v90
  %v92 = vrcp.pop %v76
  %v93 = vmul.f32 %v76, %v92
  %v94 = vsub.f32 1.0, %v93
  %v95 = vmul.f32 %v92, %v94
  %v96 = vadd.f32 %v92, %v95
  %vm97 = vweird.f32 %v76
  %vm98 = vweird.f32 %v92
  %vm99 = vmor %vm97, %vm98
  %v100 = vsel %vm99, %v92, %v96
  %v101 = vand.u32 2147483647, %v76
  %vm102 = vcmp.eq.f32.partialorder %v101, 8.507059e+37
  %v103 = vand.u32 %v76, 2147483648
  %v104 = vor.u32 1.1754944e-38, %v103
  %v105 = vsel %vm102, %v104, %v100
  %v106 = vmul.f32 1.0, %v105
  %v107 = vmul.f32 %v91, %v65
  %v108 = vmul.f32 %v106, %v66
  %v109 = vld [vmem:[%s2] sm:$0xff]
  %v110 = vld [vmem:[%s2 + $0x8] sm:$0xff]
  %v111 = vmul.f32 %v109, 0.5
  %v112 = vmul.f32 %v110, 0.5
  %115 = vrot.lane.b32.xlu0 %v111, 124
  %v116 = vpop.permute.xlu0 %115
  %117 = vrot.lane.b32.xlu0 %v112, 124
  %v118 = vpop.permute.xlu0 %117
  %v121 = vsub.f32 %v109, %v116
  %v122 = vsub.f32 %v110, %v118
  %125 = vrot.lane.b32.xlu0 %v109, 120
  %v126 = vpop.permute.xlu0 %125
  %127 = vrot.lane.b32.xlu0 %v110, 120
  %v128 = vpop.permute.xlu0 %127
  %v131 = vmul.f32 %v121, %v126
  %v132 = vmul.f32 %v122, %v128
  %v133 = vadd.f32 %v109, %v116
  %v134 = vadd.f32 %v110, %v118
  %v135 = vmul.f32 %v133, %v126
  %v136 = vmul.f32 %v134, %v128
  %139 = vrot.lane.b32.xlu0 %v131, 2
  %v140 = vpop.permute.xlu0 %139
  %141 = vrot.lane.b32.xlu0 %v132, 2
  %v142 = vpop.permute.xlu0 %141
  %147 = vrot.lane.b32.xlu0 %v135, 6
  %v148 = vpop.permute.xlu0 %147
  %149 = vrot.lane.b32.xlu0 %v136, 6
  %v150 = vpop.permute.xlu0 %149
  %155 = vrot.lane.b32.xlu0 %v107, 10
  %v156 = vpop.permute.xlu0 %155
  %157 = vrot.lane.b32.xlu0 %v108, 10
  %v158 = vpop.permute.xlu0 %157
  %vm161 = vcmask 7168
  %v162 = vsel %vm161, %v65, %v53
  %v163 = vsel %vm161, %v66, %v56
  %vm164 = vcmask 15360
  %v165 = vsel %vm164, %v162, %v140
  %v166 = vsel %vm164, %v163, %v142
  %vm167 = vcmask 48128
  %v168 = vsel %vm167, %v165, %v148
  %v169 = vsel %vm167, %v166, %v150
  %vm170 = vcmask 80896
  %v171 = vsel %vm170, %v168, %v156
  %v172 = vsel %vm170, %v169, %v158
  %vm173 = vcmask 211968
  %v174 = vsel %vm173, %v171, 0.0
  %v175 = vsel %vm173, %v172, 0.0
  %176 = vst [vmem:[%s3] sm:$0xff] %v174
  %177 = vst [vmem:[%s3 + $0x8] sm:$0xff] %v175
  // Predicated region
  $region14: #{_postprocess_core.1} parent=0 // pred_check
    _
  $region15: #{_postprocess_core.1} parent=0 // pred_check_branch
    %179 = sbr.rel (0) target = $region17
  $region16: #{_postprocess_core.1} parent=0 // pred_region
    _
  $region17: #{_postprocess_core.1} parent=0 // pred_fallthru
    _
  // Predicated region
  $region18: #{_postprocess_core.1} parent=0 // pred_check
    _
  $region19: #{_postprocess_core.1} parent=0 // pred_check_branch
    %181 = sbr.rel (0) target = $region21
  $region20: #{_postprocess_core.1} parent=0 // pred_region
    _
  $region21: #{_postprocess_core.1} parent=0 // pred_fallthru
    _

</llo_original>
